<compile_context>
chip_gen: v7x
topology: tpu7x:2x2x1
jax: 0.10.0
libtpu: 0.0.40
codegen_flags: <defaults>
</compile_context>

<pallas_src>
import functools

import jax
import jax.numpy as jnp
from jax.experimental import pallas as pl
from jax.experimental.pallas import tpu as pltpu


def _round_up(x, m):
    return ((x + m - 1) // m) * m


def _cdiv(a, b):
    return -(-a // b)


def _vision_input_kernel(patches_ref, w_ref, pos_ref, gamma_ref, beta_ref, out_ref,
                         *, inv_d, eps):
    # patches_ref: (1, TM, Kp)   w_ref: (Kp, Dp)   pos_ref: (TM, Dp)
    # gamma/beta:  (1, Dp)       out_ref: (1, TM, Dp)
    x = patches_ref[0]                       # (TM, Kp)
    w = w_ref[...]                           # (Kp, Dp)

    # Patch-embedding conv == matmul with flattened conv weight (MXU, f32 accumulate).
    emb = jnp.dot(x, w, preferred_element_type=jnp.float32)        # (TM, Dp) f32
    emb = emb + pos_ref[...].astype(jnp.float32)                   # pos already has conv bias folded

    # LayerNorm over the real embedding dim.  Padded D columns of emb are exactly 0
    # (zero-padded weight + zero-padded pos), so unmasked sums scaled by 1/D_real are
    # already the correct statistics -> no iota / mask temporaries needed.
    mean = jnp.sum(emb, axis=-1, keepdims=True) * inv_d
    var = jnp.sum(emb * emb, axis=-1, keepdims=True) * inv_d - mean * mean
    var = jnp.maximum(var, 0.0)              # guard the uncentered form (f32 stats + eps)
    normed = (emb - mean) * jax.lax.rsqrt(var + eps)
    out = normed * gamma_ref[...].astype(jnp.float32) + beta_ref[...].astype(jnp.float32)
    out_ref[0] = out.astype(out_ref.dtype)


def _const_spec(shape):
    """BlockSpec for a constant-index operand; single-buffered when supported."""
    index_map = lambda t, b: tuple(0 for _ in shape)
    try:
        return pl.BlockSpec(shape, index_map, pipeline_mode=pl.Buffered(1))
    except (TypeError, AttributeError):
        return pl.BlockSpec(shape, index_map)


def vision_input_forward(pixel_values, conv_w, conv_b, pos_emb, ln_gamma, ln_beta,
                         patch, *, matmul_dtype=jnp.bfloat16, out_dtype=None,
                         tile_tokens=512, eps=1e-5):
    """pixel_values: [B, C, H, W] (NCHW, matching PyTorch). Returns [B, Np, D]."""
    B, C, H, W = pixel_values.shape
    D = conv_w.shape[0]
    P = patch
    Hp, Wp = H // P, W // P
    Np = Hp * Wp
    K = C * P * P

    if out_dtype is None:
        out_dtype = pixel_values.dtype

    # ---- tiling / alignment ----------------------------------------------------
    Kp = _round_up(K, 128)
    Dp = _round_up(D, 128)
    TM = min(tile_tokens, _round_up(Np, 8))
    # v7x has 2 TensorCores: make sure there are at least 2 parallel grid programs.
    if B * _cdiv(Np, TM) < 2 and Np > 8:
        TM = _round_up(_cdiv(Np, 2), 8)
    Np_pad = _round_up(Np, TM)

    # ---- host-side glue ----------------------------------------------------------
    # Cast to the matmul dtype BEFORE the im2col transpose so the extra HBM pass over
    # the largest tensor moves half the bytes (bf16 default).
    # TODO(synk): for very large images prefer NHWC input (or an in-kernel gather over
    # (Hp, Wp) row strips) so this transpose does not cost an extra full HBM pass.
    px = pixel_values.astype(matmul_dtype)
    patches = px.reshape(B, C, Hp, P, Wp, P).transpose(0, 2, 4, 1, 3, 5).reshape(B, Np, K)
    patches = jnp.pad(patches, ((0, 0), (0, Np_pad - Np), (0, Kp - K)))

    # Conv weight [D, C, P, P] -> matmul weight [K, D]; fold conv bias into pos table.
    w_mat = jnp.pad(conv_w.reshape(D, K).T.astype(matmul_dtype),
                    ((0, Kp - K), (0, Dp - D)))
    pos_plus_b = (pos_emb.astype(jnp.float32)
                  + conv_b.astype(jnp.float32)[None, :]).astype(matmul_dtype)
    pos_plus_b = jnp.pad(pos_plus_b, ((0, Np_pad - Np), (0, Dp - D)))
    gamma = jnp.pad(ln_gamma.astype(jnp.float32), (0, Dp - D)).reshape(1, Dp)
    beta = jnp.pad(ln_beta.astype(jnp.float32), (0, Dp - D)).reshape(1, Dp)

    # ---- VMEM budget (leave headroom under v7x's 64 MiB physical) ---------------
    in_bytes = jnp.dtype(matmul_dtype).itemsize
    out_bytes = jnp.dtype(out_dtype).itemsize
    need = (2 * TM * Kp * in_bytes          # double-buffered patch tiles
            + Kp * Dp * in_bytes            # weight (single-buffered when supported)
            + 2 * TM * Dp * in_bytes        # double-buffered pos tiles
            + 2 * 2 * Dp * 4                # gamma / beta
            + 2 * TM * Dp * out_bytes       # double-buffered output tiles
            + 4 * TM * Dp * 4)              # f32 LN temporaries
    vmem_limit = int(min(56 * 1024 * 1024, max(32 * 1024 * 1024, 2 * need)))

    kernel = functools.partial(_vision_input_kernel, inv_d=1.0 / float(D), eps=eps)

    def run(single_buffer_consts):
        if single_buffer_consts:
            w_spec, g_spec, b_spec = _const_spec((Kp, Dp)), _const_spec((1, Dp)), _const_spec((1, Dp))
        else:
            w_spec = pl.BlockSpec((Kp, Dp), lambda t, b: (0, 0))
            g_spec = pl.BlockSpec((1, Dp), lambda t, b: (0, 0))
            b_spec = pl.BlockSpec((1, Dp), lambda t, b: (0, 0))
        return pl.pallas_call(
            kernel,
            out_shape=jax.ShapeDtypeStruct((B, Np_pad, Dp), out_dtype),
            grid_spec=pltpu.PrefetchScalarGridSpec(
                num_scalar_prefetch=0,
                # Batch innermost: pos tile block-index is unchanged across consecutive
                # steps, so its DMA is skipped (read the pos table once, not B times).
                grid=(Np_pad // TM, B),
                in_specs=[
                    pl.BlockSpec((1, TM, Kp), lambda t, b: (b, t, 0)),   # patch tile
                    w_spec,                                              # weight (const)
                    pl.BlockSpec((TM, Dp), lambda t, b: (t, 0)),         # pos(+bias) tile
                    g_spec,                                              # gamma (const)
                    b_spec,                                              # beta (const)
                ],
                out_specs=pl.BlockSpec((1, TM, Dp), lambda t, b: (b, t, 0)),
            ),
            compiler_params=pltpu.CompilerParams(
                dimension_semantics=("parallel", "parallel"),
                vmem_limit_bytes=vmem_limit,
            ),
        )(patches, w_mat, pos_plus_b, gamma, beta)

    try:
        out = run(single_buffer_consts=True)
    except Exception:   # older Pallas without per-operand pipeline_mode support
        out = run(single_buffer_consts=False)

    # Strip token/lane padding only when actually needed (avoids an extra HBM pass
    # for common ViT dims where D is already a multiple of 128).
    if Np_pad == Np and Dp == D:
        return out
    return out[:, :Np, :D]


def reference_forward(pixel_values, conv_w, conv_b, pos_emb, ln_gamma, ln_beta, patch):
    """Plain-JAX reference (same math as PyTorch Conv2d + pos + LayerNorm)."""
    out = jax.lax.conv_general_dilated(
        pixel_values.astype(jnp.float32), conv_w.astype(jnp.float32),
        window_strides=(patch, patch), padding="VALID",
        dimension_numbers=("NCHW", "OIHW", "NCHW"))
    B, D, Hp, Wp = out.shape
    out = out.reshape(B, D, Hp * Wp).transpose(0, 2, 1)  # [B, Np, D]
    out = out + conv_b.reshape(1, 1, D) + pos_emb[None]
    mean = out.mean(-1, keepdims=True)
    var = ((out - mean) ** 2).mean(-1, keepdims=True)
    out = (out - mean) * jax.lax.rsqrt(var + 1e-5)
    return out * ln_gamma.reshape(1, 1, D) + ln_beta.reshape(1, 1, D)


if __name__ == "__main__":
    B, C, H, W = 2, 4, 16, 16
    P = 8                       # patch size
    D = 32                      # embed dim
    Np = (H // P) * (W // P)    # 4 patches

    key = jax.random.PRNGKey(0)
    k_px, k_w, k_b, k_pos = jax.random.split(key, 4)

    pixel_values = jax.random.normal(k_px, (B, C, H, W), dtype=jnp.float32)
    conv_w = jax.random.normal(k_w, (D, C, P, P), dtype=jnp.float32) * 0.02
    conv_b = jax.random.normal(k_b, (D,), dtype=jnp.float32) * 0.02
    pos_emb = jax.random.normal(k_pos, (Np, D), dtype=jnp.float32) * 0.02
    ln_gamma = jnp.ones((D,), dtype=jnp.float32)
    ln_beta = jnp.zeros((D,), dtype=jnp.float32)

    ref = reference_forward(pixel_values, conv_w, conv_b, pos_emb, ln_gamma, ln_beta, P)

    # f32 matmul path (tight check).
    out_f32 = vision_input_forward(pixel_values, conv_w, conv_b, pos_emb,
                                   ln_gamma, ln_beta, P,
                                   matmul_dtype=jnp.float32)
    out_f32 = jax.block_until_ready(out_f32)
    assert out_f32.shape == (B, Np, D)
    assert jnp.allclose(out_f32, ref, atol=1e-4, rtol=1e-4)

    # Default bf16 MXU-input path (v6e/v7x-native); LN math stays f32 inside the kernel.
    out_bf = vision_input_forward(pixel_values, conv_w, conv_b, pos_emb,
                                  ln_gamma, ln_beta, P)
    out_bf = jax.block_until_ready(out_bf)
    assert out_bf.shape == (B, Np, D)
    assert jnp.allclose(out_bf.astype(jnp.float32), ref, atol=5e-2, rtol=5e-2)

    print("KERNEL_OK")
</pallas_src>

<mosaic_0001>
module attributes {stable_mosaic.version = 11 : i64} {
  func.func @_vision_input_kernel(%arg0: i32, %arg1: i32, %arg2: memref<1x8x256xf32, #tpu.memory_space<vmem>>, %arg3: memref<256x128xf32, #tpu.memory_space<vmem>>, %arg4: memref<8x128xf32, #tpu.memory_space<vmem>>, %arg5: memref<1x128xf32, #tpu.memory_space<vmem>>, %arg6: memref<1x128xf32, #tpu.memory_space<vmem>>, %arg7: memref<1x8x128xf32, #tpu.memory_space<vmem>>) attributes {dimension_semantics = [#tpu.dimension_semantics<parallel>, #tpu.dimension_semantics<parallel>], iteration_bounds = array<i64: 1, 2>, scalar_prefetch = 0 : i64, scratch_operands = 0 : i64, tpu.core_type = #tpu.core_type<tc>, window_params = [{transform_indices = @transform_0, window_bounds = array<i64: 1, 8, 256>}, {pipeline_mode = #tpu.pipeline_mode<synchronous>, transform_indices = @transform_1, window_bounds = array<i64: 256, 128>}, {transform_indices = @transform_2, window_bounds = array<i64: 8, 128>}, {pipeline_mode = #tpu.pipeline_mode<synchronous>, transform_indices = @transform_3, window_bounds = array<i64: 1, 128>}, {pipeline_mode = #tpu.pipeline_mode<synchronous>, transform_indices = @transform_4, window_bounds = array<i64: 1, 128>}, {transform_indices = @transform_5, window_bounds = array<i64: 1, 8, 128>}]} {
    %c0 = arith.constant 0 : index
    %c0_0 = arith.constant 0 : index
    %c0_1 = arith.constant 0 : index
    %0 = vector.load %arg2[%c0, %c0_0, %c0_1] : memref<1x8x256xf32, #tpu.memory_space<vmem>>, vector<1x8x256xf32>
    %1 = vector.shape_cast %0 : vector<1x8x256xf32> to vector<8x256xf32>
    %c0_2 = arith.constant 0 : index
    %c0_3 = arith.constant 0 : index
    %2 = vector.load %arg3[%c0_2, %c0_3] : memref<256x128xf32, #tpu.memory_space<vmem>>, vector<256x128xf32>
    %cst = arith.constant dense<0.000000e+00> : vector<8x128xf32>
    %3 = tpu.matmul %1, %2, %cst {dimension_numbers = #tpu.dot_dimension_numbers<[1], [0], [0], [1], [0, 0, 1, 1], [], []>} : vector<8x256xf32>, vector<256x128xf32>, vector<8x128xf32> -> vector<8x128xf32>
    %c0_4 = arith.constant 0 : index
    %c0_5 = arith.constant 0 : index
    %4 = vector.load %arg4[%c0_4, %c0_5] : memref<8x128xf32, #tpu.memory_space<vmem>>, vector<8x128xf32>
    %5 = arith.addf %3, %4 : vector<8x128xf32>
    %cst_6 = arith.constant dense<0.000000e+00> : vector<8xf32>
    %6 = vector.multi_reduction <add>, %5, %cst_6 [1] : vector<8x128xf32> to vector<8xf32>
    %7 = vector.shape_cast %6 : vector<8xf32> to vector<8x1xf32>
    %cst_7 = arith.constant 3.125000e-02 : f32
    %8 = vector.broadcast %cst_7 : f32 to vector<8x1xf32>
    %9 = arith.mulf %7, %8 : vector<8x1xf32>
    %10 = arith.mulf %5, %5 : vector<8x128xf32>
    %cst_8 = arith.constant dense<0.000000e+00> : vector<8xf32>
    %11 = vector.multi_reduction <add>, %10, %cst_8 [1] : vector<8x128xf32> to vector<8xf32>
    %12 = vector.shape_cast %11 : vector<8xf32> to vector<8x1xf32>
    %cst_9 = arith.constant 3.125000e-02 : f32
    %13 = vector.broadcast %cst_9 : f32 to vector<8x1xf32>
    %14 = arith.mulf %12, %13 : vector<8x1xf32>
    %15 = arith.mulf %9, %9 : vector<8x1xf32>
    %16 = arith.subf %14, %15 : vector<8x1xf32>
    %cst_10 = arith.constant 0.000000e+00 : f32
    %17 = vector.broadcast %cst_10 : f32 to vector<8x1xf32>
    %18 = arith.maximumf %16, %17 : vector<8x1xf32>
    %19 = vector.broadcast %9 : vector<8x1xf32> to vector<8x128xf32>
    %20 = arith.subf %5, %19 : vector<8x128xf32>
    %cst_11 = arith.constant 9.99999974E-6 : f32
    %21 = vector.broadcast %cst_11 : f32 to vector<8x1xf32>
    %22 = arith.addf %18, %21 : vector<8x1xf32>
    %23 = math.rsqrt %22 : vector<8x1xf32>
    %24 = vector.broadcast %23 : vector<8x1xf32> to vector<8x128xf32>
    %25 = arith.mulf %20, %24 : vector<8x128xf32>
    %c0_12 = arith.constant 0 : index
    %c0_13 = arith.constant 0 : index
    %26 = vector.load %arg5[%c0_12, %c0_13] : memref<1x128xf32, #tpu.memory_space<vmem>>, vector<1x128xf32>
    %27 = vector.broadcast %26 : vector<1x128xf32> to vector<8x128xf32>
    %28 = arith.mulf %25, %27 : vector<8x128xf32>
    %c0_14 = arith.constant 0 : index
    %c0_15 = arith.constant 0 : index
    %29 = vector.load %arg6[%c0_14, %c0_15] : memref<1x128xf32, #tpu.memory_space<vmem>>, vector<1x128xf32>
    %30 = vector.broadcast %29 : vector<1x128xf32> to vector<8x128xf32>
    %31 = arith.addf %28, %30 : vector<8x128xf32>
    %c0_16 = arith.constant 0 : index
    %c0_17 = arith.constant 0 : index
    %c0_18 = arith.constant 0 : index
    %32 = vector.load %arg7[%c0_16, %c0_17, %c0_18] : memref<1x8x128xf32, #tpu.memory_space<vmem>>, vector<1x8x128xf32>
    %33 = vector.shape_cast %32 : vector<1x8x128xf32> to vector<8x128xf32>
    %34 = vector.shape_cast %31 : vector<8x128xf32> to vector<1x8x128xf32>
    tpu.vector_store %arg7[%c0_16, %c0_17, %c0_18], %34 {strides = array<i32>} : memref<1x8x128xf32, #tpu.memory_space<vmem>>, vector<1x8x128xf32>,
    return
  }
  func.func @transform_0(%arg0: i32, %arg1: i32) -> (i32, i32, i32) {
    %c0_i32 = arith.constant 0 : i32
    %c0_i32_0 = arith.constant 0 : i32
    return %arg1, %arg0, %c0_i32 : i32, i32, i32
  }
  func.func @transform_1(%arg0: i32, %arg1: i32) -> (i32, i32) {
    %c0_i32 = arith.constant 0 : i32
    %c0_i32_0 = arith.constant 0 : i32
    %c0_i32_1 = arith.constant 0 : i32
    return %c0_i32, %c0_i32_0 : i32, i32
  }
  func.func @transform_2(%arg0: i32, %arg1: i32) -> (i32, i32) {
    %c0_i32 = arith.constant 0 : i32
    %c0_i32_0 = arith.constant 0 : i32
    return %arg0, %c0_i32 : i32, i32
  }
  func.func @transform_3(%arg0: i32, %arg1: i32) -> (i32, i32) {
    %c0_i32 = arith.constant 0 : i32
    %c0_i32_0 = arith.constant 0 : i32
    %c0_i32_1 = arith.constant 0 : i32
    return %c0_i32, %c0_i32_0 : i32, i32
  }
  func.func @transform_4(%arg0: i32, %arg1: i32) -> (i32, i32) {
    %c0_i32 = arith.constant 0 : i32
    %c0_i32_0 = arith.constant 0 : i32
    %c0_i32_1 = arith.constant 0 : i32
    return %c0_i32, %c0_i32_0 : i32, i32
  }
  func.func @transform_5(%arg0: i32, %arg1: i32) -> (i32, i32, i32) {
    %c0_i32 = arith.constant 0 : i32
    %c0_i32_0 = arith.constant 0 : i32
    return %arg1, %arg0, %c0_i32 : i32, i32, i32
  }
}

module attributes {stable_mosaic.version = 11 : i64} {
  func.func @_vision_input_kernel(%arg0: i32, %arg1: i32, %arg2: memref<1x8x256xf32, #tpu.memory_space<vmem>>, %arg3: memref<256x128xf32, #tpu.memory_space<vmem>>, %arg4: memref<8x128xf32, #tpu.memory_space<vmem>>, %arg5: memref<1x128xf32, #tpu.memory_space<vmem>>, %arg6: memref<1x128xf32, #tpu.memory_space<vmem>>, %arg7: memref<1x8x128xf32, #tpu.memory_space<vmem>>) attributes {dimension_semantics = [#tpu.dimension_semantics<parallel>, #tpu.dimension_semantics<parallel>], iteration_bounds = array<i64: 1, 2>, scalar_prefetch = 0 : i64, scratch_operands = 0 : i64, tpu.core_type = #tpu.core_type<tc>, window_params = [{transform_indices = @transform_0, window_bounds = array<i64: 1, 8, 256>}, {pipeline_mode = #tpu.pipeline_mode<synchronous>, transform_indices = @transform_1, window_bounds = array<i64: 256, 128>}, {transform_indices = @transform_2, window_bounds = array<i64: 8, 128>}, {pipeline_mode = #tpu.pipeline_mode<synchronous>, transform_indices = @transform_3, window_bounds = array<i64: 1, 128>}, {pipeline_mode = #tpu.pipeline_mode<synchronous>, transform_indices = @transform_4, window_bounds = array<i64: 1, 128>}, {transform_indices = @transform_5, window_bounds = array<i64: 1, 8, 128>}]} {
    %c0 = arith.constant 0 : index
    %c0_0 = arith.constant 0 : index
    %c0_1 = arith.constant 0 : index
    %0 = vector.load %arg2[%c0, %c0_0, %c0_1] : memref<1x8x256xf32, #tpu.memory_space<vmem>>, vector<1x8x256xf32>
    %1 = vector.shape_cast %0 : vector<1x8x256xf32> to vector<8x256xf32>
    %c0_2 = arith.constant 0 : index
    %c0_3 = arith.constant 0 : index
    %2 = vector.load %arg3[%c0_2, %c0_3] : memref<256x128xf32, #tpu.memory_space<vmem>>, vector<256x128xf32>
    %cst = arith.constant dense<0.000000e+00> : vector<8x128xf32>
    %3 = tpu.matmul %1, %2, %cst {dimension_numbers = #tpu.dot_dimension_numbers<[1], [0], [0], [1], [0, 0, 1, 1], [], []>} : vector<8x256xf32>, vector<256x128xf32>, vector<8x128xf32> -> vector<8x128xf32>
    %c0_4 = arith.constant 0 : index
    %c0_5 = arith.constant 0 : index
    %4 = vector.load %arg4[%c0_4, %c0_5] : memref<8x128xf32, #tpu.memory_space<vmem>>, vector<8x128xf32>
    %5 = arith.addf %3, %4 : vector<8x128xf32>
    %cst_6 = arith.constant dense<0.000000e+00> : vector<8xf32>
    %6 = vector.multi_reduction <add>, %5, %cst_6 [1] : vector<8x128xf32> to vector<8xf32>
    %7 = vector.shape_cast %6 : vector<8xf32> to vector<8x1xf32>
    %cst_7 = arith.constant 3.125000e-02 : f32
    %8 = vector.broadcast %cst_7 : f32 to vector<8x1xf32>
    %9 = arith.mulf %7, %8 : vector<8x1xf32>
    %10 = arith.mulf %5, %5 : vector<8x128xf32>
    %cst_8 = arith.constant dense<0.000000e+00> : vector<8xf32>
    %11 = vector.multi_reduction <add>, %10, %cst_8 [1] : vector<8x128xf32> to vector<8xf32>
    %12 = vector.shape_cast %11 : vector<8xf32> to vector<8x1xf32>
    %cst_9 = arith.constant 3.125000e-02 : f32
    %13 = vector.broadcast %cst_9 : f32 to vector<8x1xf32>
    %14 = arith.mulf %12, %13 : vector<8x1xf32>
    %15 = arith.mulf %9, %9 : vector<8x1xf32>
    %16 = arith.subf %14, %15 : vector<8x1xf32>
    %cst_10 = arith.constant 0.000000e+00 : f32
    %17 = vector.broadcast %cst_10 : f32 to vector<8x1xf32>
    %18 = arith.maximumf %16, %17 : vector<8x1xf32>
    %19 = vector.broadcast %9 : vector<8x1xf32> to vector<8x128xf32>
    %20 = arith.subf %5, %19 : vector<8x128xf32>
    %cst_11 = arith.constant 9.99999974E-6 : f32
    %21 = vector.broadcast %cst_11 : f32 to vector<8x1xf32>
    %22 = arith.addf %18, %21 : vector<8x1xf32>
    %23 = math.rsqrt %22 : vector<8x1xf32>
    %24 = vector.broadcast %23 : vector<8x1xf32> to vector<8x128xf32>
    %25 = arith.mulf %20, %24 : vector<8x128xf32>
    %c0_12 = arith.constant 0 : index
    %c0_13 = arith.constant 0 : index
    %26 = vector.load %arg5[%c0_12, %c0_13] : memref<1x128xf32, #tpu.memory_space<vmem>>, vector<1x128xf32>
    %27 = vector.broadcast %26 : vector<1x128xf32> to vector<8x128xf32>
    %28 = arith.mulf %25, %27 : vector<8x128xf32>
    %c0_14 = arith.constant 0 : index
    %c0_15 = arith.constant 0 : index
    %29 = vector.load %arg6[%c0_14, %c0_15] : memref<1x128xf32, #tpu.memory_space<vmem>>, vector<1x128xf32>
    %30 = vector.broadcast %29 : vector<1x128xf32> to vector<8x128xf32>
    %31 = arith.addf %28, %30 : vector<8x128xf32>
    %c0_16 = arith.constant 0 : index
    %c0_17 = arith.constant 0 : index
    %c0_18 = arith.constant 0 : index
    %32 = vector.load %arg7[%c0_16, %c0_17, %c0_18] : memref<1x8x128xf32, #tpu.memory_space<vmem>>, vector<1x8x128xf32>
    %33 = vector.shape_cast %32 : vector<1x8x128xf32> to vector<8x128xf32>
    %34 = vector.shape_cast %31 : vector<8x128xf32> to vector<1x8x128xf32>
    tpu.vector_store %arg7[%c0_16, %c0_17, %c0_18], %34 {strides = array<i32>} : memref<1x8x128xf32, #tpu.memory_space<vmem>>, vector<1x8x128xf32>,
    return
  }
  func.func @transform_0(%arg0: i32, %arg1: i32) -> (i32, i32, i32) {
    %c0_i32 = arith.constant 0 : i32
    %c0_i32_0 = arith.constant 0 : i32
    return %arg1, %arg0, %c0_i32 : i32, i32, i32
  }
  func.func @transform_1(%arg0: i32, %arg1: i32) -> (i32, i32) {
    %c0_i32 = arith.constant 0 : i32
    %c0_i32_0 = arith.constant 0 : i32
    %c0_i32_1 = arith.constant 0 : i32
    return %c0_i32, %c0_i32_0 : i32, i32
  }
  func.func @transform_2(%arg0: i32, %arg1: i32) -> (i32, i32) {
    %c0_i32 = arith.constant 0 : i32
    %c0_i32_0 = arith.constant 0 : i32
    return %arg0, %c0_i32 : i32, i32
  }
  func.func @transform_3(%arg0: i32, %arg1: i32) -> (i32, i32) {
    %c0_i32 = arith.constant 0 : i32
    %c0_i32_0 = arith.constant 0 : i32
    %c0_i32_1 = arith.constant 0 : i32
    return %c0_i32, %c0_i32_0 : i32, i32
  }
  func.func @transform_4(%arg0: i32, %arg1: i32) -> (i32, i32) {
    %c0_i32 = arith.constant 0 : i32
    %c0_i32_0 = arith.constant 0 : i32
    %c0_i32_1 = arith.constant 0 : i32
    return %c0_i32, %c0_i32_0 : i32, i32
  }
  func.func @transform_5(%arg0: i32, %arg1: i32) -> (i32, i32, i32) {
    %c0_i32 = arith.constant 0 : i32
    %c0_i32_0 = arith.constant 0 : i32
    return %arg1, %arg0, %c0_i32 : i32, i32, i32
  }
}

</mosaic_0001>

<llo_original>
// kernel: tpu_custom_call.1
$region0: #{tpu_custom_call.1}
  #allocation0 [shape = 'u32[]', space=smem, size = 0x4, offset = 0x4, fixed_abs, tag = 'smem constant byte address 0x4 - core index']
  #allocation1 [shape = 'u32[144,128]{1,0:T(1,128)}', space=vmem, size = 0x12000, scoped, tag = 'internal scratch']
  %s0 = inlined_call_operand.hbm [shape: f32[2,8,256], index: 0, kind: input, shape index: {}]
  %s1 = inlined_call_operand.hbm [shape: f32[256,128], index: 1, kind: input, shape index: {}]
  %s2 = inlined_call_operand.hbm [shape: f32[8,128], index: 2, kind: input, shape index: {}]
  %s3 = inlined_call_operand.vmem [shape: f32[1,128], index: 3, kind: input, shape index: {}]
  %s4 = inlined_call_operand.vmem [shape: f32[1,128], index: 4, kind: input, shape index: {}]
  %s5 = inlined_call_operand.hbm [shape: f32[2,8,128], index: 5, kind: output, shape index: {}]
  %s6 = sld [smem:[#allocation0]]
  $region65: #{tpu_custom_call.1} parent=0
    _
  %s8 = ssub.s32 1, %s6
  %s9 = scalar_select 0, %s8, %s6
  $region1: #{tpu_custom_call.1} parent=0
    #allocation2 [shape = 'u8[16384]{0}', space=vmem, size = 0x4000, scoped, tag = 'input window, operand 0']
    #allocation3 [shape = 's32[2]{0}', space=sflag, size = 0x8, scoped, tag = 'scoped memory for tpu_custom_call.1']
    #allocation4 [shape = 's32[2]{0}', space=sflag, size = 0x8, scoped, tag = 'scoped memory for tpu_custom_call.1']
    #allocation5 [shape = 'u8[131072]{0}', space=vmem, size = 0x20000, scoped, tag = 'input window, operand 1, single buffered']
    #allocation6 [shape = 's32[1]{0}', space=sflag, size = 0x4, scoped, tag = 'scoped memory for tpu_custom_call.1']
    #allocation7 [shape = 'u8[4096]{0}', space=vmem, size = 0x1000, scoped, tag = 'input window, operand 2, single buffered']
    #allocation8 [shape = 'u8[8192]{0}', space=vmem, size = 0x2000, scoped, tag = 'output window, operand 0']
    %10 = vsyncpa [#allocation3], 0
    %s11 = scalar_lea.sflag [#allocation3], 1
    %12 = vsyncpa %s11, 0
    %13 = vsyncpa [#allocation6], 0
    %14 = vsyncpa [#allocation4], 0
    %s15 = scalar_lea.sflag [#allocation4], 1
    %16 = vsyncpa %s15, 0
    loop: start=0, step=1, limit=4
    $region2: #{tpu_custom_call.1} parent=1 // loop_pre_header
      _
    $region3: #{tpu_custom_call.1} parent=1 // loop_header
      %s18 = sphi 0, %s22
      %p19 = scmp.ge.s32.totalorder %s18, 4
      %s25 = sphi 0, %s37
      %s26 = sphi 0, %s33
      %s27 = sphi 0, %s25
      %s28 = sphi 0, %s26
      %s29 = sphi 0, %s27
      %s30 = sphi 0, %s28
      %s42 = sphi 0, %s44
      %s45 = sphi 0, %s42
      %s46 = sphi 0, %s45
      %s62 = sphi 0, %s46
      %s66 = sphi 0, %s66
      %s68 = sphi 0, %s66
      %s69 = sphi 0, %s68
      %s83 = sphi 0, %s69
      %s89 = sphi 0, %s91
      %s92 = sphi 0, %s89
      %s93 = sphi 0, %s92
      %s109 = sphi 0, %s93
      %s113 = sphi 0, %s113
      %s115 = sphi 0, %s113
      %s116 = sphi 0, %s115
      %s130 = sphi 0, %s116
      %s134 = sphi 0, %s134
      %s136 = sphi 0, %s134
      %s137 = sphi 0, %s136
      %s151 = sphi 0, %s137
      %s159 = sphi 0, %s161
      %s162 = sphi 0, %s159
      %s163 = sphi 0, %s162
      %s179 = sphi 0, %s163
    $region4: #{tpu_custom_call.1} parent=1 // loop_header_branch
      %21 = sbr.rel (%p19) target = $region8
    $region5: #{tpu_custom_call.1} parent=1 // loop_body
      %s23 = ssub.s32 %s18, 1
      %s24 = ssub.s32 %s18, 2
      %s31 = sadd.s32 1, %s26
      %p32 = scmp.ge.s32.totalorder %s31, 2
      %s33 = scalar_select %p32, 0, %s31
      %s34 = sadd.s32 1, %s25
      %s35 = scalar_select %p32, %s34, %s25
      %p36 = scmp.ge.s32.totalorder %s35, 1
      %s37 = scalar_select %p36, 0, %s35
      %s38 = ssub.s32 %s26, %s33
      %s39 = ssub.s32 %s25, %s37
      %s40 = sor.u32 %s38, %s39
      %p41 = scmp.eq.s32.totalorder %s40, 0
      %s43 = sadd.s32 %s42, 1
      %s44 = scalar_select %p41, %s42, %s43
      %p47 = pneg %p41
      %p48 = scmp.eq.s32.totalorder %s18, 1
      %p49 = por %p47, %p48
      %p50 = scmp.ne.s32.totalorder %s42, %s45
      %p51 = scmp.eq.s32.totalorder %s18, 0
      %p52 = por %p50, %p51
      %p53 = scmp.ne.s32.totalorder %s42, %s45
      %p54 = scmp.eq.s32.totalorder %s23, 1
      %p55 = por %p53, %p54
      %p56 = scmp.ne.s32.totalorder %s45, %s46
      %p57 = scmp.eq.s32.totalorder %s23, 0
      %p58 = por %p56, %p57
      %p59 = scmp.ne.s32.totalorder %s45, %s46
      %p60 = scmp.eq.s32.totalorder %s24, 1
      %p61 = por %p59, %p60
      %p63 = scmp.ne.s32.totalorder %s46, %s62
      %p64 = scmp.eq.s32.totalorder %s24, 0
      %p65 = por %p63, %p64
      %s67 = sadd.s32 %s66, 1
      %p70 = scmp.eq.s32.totalorder %s18, 1
      %p71 = scmp.ne.s32.totalorder %s66, %s68
      %p72 = scmp.eq.s32.totalorder %s18, 0
      %p73 = por %p71, %p72
      %p74 = scmp.ne.s32.totalorder %s66, %s68
      %p75 = scmp.eq.s32.totalorder %s23, 1
      %p76 = por %p74, %p75
      %p77 = scmp.ne.s32.totalorder %s68, %s69
      %p78 = scmp.eq.s32.totalorder %s23, 0
      %p79 = por %p77, %p78
      %p80 = scmp.ne.s32.totalorder %s68, %s69
      %p81 = scmp.eq.s32.totalorder %s24, 1
      %p82 = por %p80, %p81
      %p84 = scmp.ne.s32.totalorder %s69, %s83
      %p85 = scmp.eq.s32.totalorder %s24, 0
      %p86 = por %p84, %p85
      %s87 = ssub.s32 %s25, %s37
      %p88 = scmp.eq.s32.totalorder %s87, 0
      %s90 = sadd.s32 %s89, 1
      %s91 = scalar_select %p88, %s89, %s90
      %p94 = pneg %p88
      %p95 = scmp.eq.s32.totalorder %s18, 1
      %p96 = por %p94, %p95
      %p97 = scmp.ne.s32.totalorder %s89, %s92
      %p98 = scmp.eq.s32.totalorder %s18, 0
      %p99 = por %p97, %p98
      %p100 = scmp.ne.s32.totalorder %s89, %s92
      %p101 = scmp.eq.s32.totalorder %s23, 1
      %p102 = por %p100, %p101
      %p103 = scmp.ne.s32.totalorder %s92, %s93
      %p104 = scmp.eq.s32.totalorder %s23, 0
      %p105 = por %p103, %p104
      %p106 = scmp.ne.s32.totalorder %s92, %s93
      %p107 = scmp.eq.s32.totalorder %s24, 1
      %p108 = por %p106, %p107
      %p110 = scmp.ne.s32.totalorder %s93, %s109
      %p111 = scmp.eq.s32.totalorder %s24, 0
      %p112 = por %p110, %p111
      %s114 = sadd.s32 %s113, 1
      %p117 = scmp.eq.s32.totalorder %s18, 1
      %p118 = scmp.ne.s32.totalorder %s113, %s115
      %p119 = scmp.eq.s32.totalorder %s18, 0
      %p120 = por %p118, %p119
      %p121 = scmp.ne.s32.totalorder %s113, %s115
      %p122 = scmp.eq.s32.totalorder %s23, 1
      %p123 = por %p121, %p122
      %p124 = scmp.ne.s32.totalorder %s115, %s116
      %p125 = scmp.eq.s32.totalorder %s23, 0
      %p126 = por %p124, %p125
      %p127 = scmp.ne.s32.totalorder %s115, %s116
      %p128 = scmp.eq.s32.totalorder %s24, 1
      %p129 = por %p127, %p128
      %p131 = scmp.ne.s32.totalorder %s116, %s130
      %p132 = scmp.eq.s32.totalorder %s24, 0
      %p133 = por %p131, %p132
      %s135 = sadd.s32 %s134, 1
      %p138 = scmp.eq.s32.totalorder %s18, 1
      %p139 = scmp.ne.s32.totalorder %s134, %s136
      %p140 = scmp.eq.s32.totalorder %s18, 0
      %p141 = por %p139, %p140
      %p142 = scmp.ne.s32.totalorder %s134, %s136
      %p143 = scmp.eq.s32.totalorder %s23, 1
      %p144 = por %p142, %p143
      %p145 = scmp.ne.s32.totalorder %s136, %s137
      %p146 = scmp.eq.s32.totalorder %s23, 0
      %p147 = por %p145, %p146
      %p148 = scmp.ne.s32.totalorder %s136, %s137
      %p149 = scmp.eq.s32.totalorder %s24, 1
      %p150 = por %p148, %p149
      %p152 = scmp.ne.s32.totalorder %s137, %s151
      %p153 = scmp.eq.s32.totalorder %s24, 0
      %p154 = por %p152, %p153
      %s155 = ssub.s32 %s26, %s33
      %s156 = ssub.s32 %s25, %s37
      %s157 = sor.u32 %s155, %s156
      %p158 = scmp.eq.s32.totalorder %s157, 0
      %s160 = sadd.s32 %s159, 1
      %s161 = scalar_select %p158, %s159, %s160
      %p164 = pneg %p158
      %p165 = scmp.eq.s32.totalorder %s18, 1
      %p166 = por %p164, %p165
      %p167 = scmp.ne.s32.totalorder %s159, %s162
      %p168 = scmp.eq.s32.totalorder %s18, 0
      %p169 = por %p167, %p168
      %p170 = scmp.ne.s32.totalorder %s159, %s162
      %p171 = scmp.eq.s32.totalorder %s23, 1
      %p172 = por %p170, %p171
      %p173 = scmp.ne.s32.totalorder %s162, %s163
      %p174 = scmp.eq.s32.totalorder %s23, 0
      %p175 = por %p173, %p174
      %p176 = scmp.ne.s32.totalorder %s162, %s163
      %p177 = scmp.eq.s32.totalorder %s24, 1
      %p178 = por %p176, %p177
      %p180 = scmp.ne.s32.totalorder %s163, %s179
      %p181 = scmp.eq.s32.totalorder %s24, 0
      %p182 = por %p180, %p181
      %p183 = scmp.le.s32.totalorder 1, %s18
      %p184 = scmp.lt.s32.totalorder %s18, 3
      %p185 = pnand %p183, %p184
      %p186 = pneg %p185
      // Predicated region
      $region9: #{tpu_custom_call.1} parent=5 // pred_check
        _
      $region10: #{tpu_custom_call.1} parent=5 // pred_check_branch
        %188 = sbr.rel (%p185) target = $region12
      $region11: #{tpu_custom_call.1} parent=5 // pred_region
        %s189 = ssub.s32 %s18, 1
        // Predicated region
        $region13: #{tpu_custom_call.1} parent=11 // pred_check
          %p190 = pneg %p79
        $region14: #{tpu_custom_call.1} parent=11 // pred_check_branch
          %192 = sbr.rel (%p190) target = $region16
        $region15: #{tpu_custom_call.1} parent=11 // pred_region
          %s194 = ssub.s32 4096, 4096
          %195 = vsyncadd [#allocation6], %s194
          %s196 = sshll.u32 [#allocation5], 4
          %s197 = int_to_ptr.vmem [resolvable:$true] %s196
          %202 = dma.hbm_to_vmem [thread:$0]  %s1, 4096, %s197, [#allocation6], 128, 128, 8
        $region16: #{tpu_custom_call.1} parent=11 // pred_fallthru
          _
        // Predicated region
        $region17: #{tpu_custom_call.1} parent=11 // pred_check
          %p203 = pneg %p105
        $region18: #{tpu_custom_call.1} parent=11 // pred_check_branch
          %205 = sbr.rel (%p203) target = $region20
        $region19: #{tpu_custom_call.1} parent=11 // pred_region
          %s207 = ssub.s32 128, 128
          %208 = vsyncadd [#allocation6], %s207
          %s209 = smul.addr %s27, 128
          %s210 = scalar_lea.hbm %s2, %s209
          %s212 = sshll.u32 [#allocation7], 4
          %s213 = int_to_ptr.vmem [resolvable:$true] %s212
          %215 = dma.hbm_to_vmem [thread:$0]  %s210, 128, %s213, [#allocation6]
        $region20: #{tpu_custom_call.1} parent=11 // pred_fallthru
          _
        // Predicated region
        $region21: #{tpu_custom_call.1} parent=11 // pred_check
          %p216 = pneg %p126
        $region22: #{tpu_custom_call.1} parent=11 // pred_check_branch
          %218 = sbr.rel (%p216) target = $region24
        $region23: #{tpu_custom_call.1} parent=11 // pred_region
          _
        $region24: #{tpu_custom_call.1} parent=11 // pred_fallthru
          _
        // Predicated region
        $region25: #{tpu_custom_call.1} parent=11 // pred_check
          %p219 = pneg %p147
        $region26: #{tpu_custom_call.1} parent=11 // pred_check_branch
          %221 = sbr.rel (%p219) target = $region28
        $region27: #{tpu_custom_call.1} parent=11 // pred_region
          _
        $region28: #{tpu_custom_call.1} parent=11 // pred_fallthru
          _
      $region12: #{tpu_custom_call.1} parent=5 // pred_fallthru
        _
      %p222 = scmp.lt.s32.totalorder %s18, 2
      // Predicated region
      $region29: #{tpu_custom_call.1} parent=5 // pred_check
        %p223 = pneg %p222
      $region30: #{tpu_custom_call.1} parent=5 // pred_check_branch
        %225 = sbr.rel (%p223) target = $region32
      $region31: #{tpu_custom_call.1} parent=5 // pred_region
        // Predicated region
        $region33: #{tpu_custom_call.1} parent=31 // pred_check
          %p226 = pneg %p52
        $region34: #{tpu_custom_call.1} parent=31 // pred_check_branch
          %228 = sbr.rel (%p226) target = $region36
        $region35: #{tpu_custom_call.1} parent=31 // pred_region
          %s229 = sand.u32 %s42, 1
          %s230 = scalar_lea.sflag [#allocation3], %s229
          %s231 = sand.u32 %s42, 1
          %s232 = smul.addr %s231, 16
          %s233 = scalar_lea.vmem [#allocation2], %s232
          %s235 = ssub.s32 256, 256
          %236 = vsyncadd %s230, %s235
          %s237 = smul.addr %s25, 2
          %s238 = smul.addr %s26, 2
          %s239 = sadd.s32 %s237, %s238
          %s240 = smul.addr %s239, 128
          %s241 = scalar_lea.hbm %s0, %s240
          %s243 = sshll.u32 %s233, 4
          %s244 = int_to_ptr.vmem [resolvable:$true] %s243
          %246 = dma.hbm_to_vmem [thread:$0]  %s241, 256, %s244, %s230
        $region36: #{tpu_custom_call.1} parent=31 // pred_fallthru
          _
      $region32: #{tpu_custom_call.1} parent=5 // pred_fallthru
        _
      %p247 = scmp.le.s32.totalorder 1, %s18
      %p248 = scmp.lt.s32.totalorder %s18, 3
      %p249 = pnand %p247, %p248
      %p250 = pneg %p249
      // Predicated region
      $region37: #{tpu_custom_call.1} parent=5 // pred_check
        _
      $region38: #{tpu_custom_call.1} parent=5 // pred_check_branch
        %252 = sbr.rel (%p249) target = $region40
      $region39: #{tpu_custom_call.1} parent=5 // pred_region
        %s253 = ssub.s32 %s18, 1
        %s254 = sand.u32 %s45, 1
        %s255 = scalar_lea.sflag [#allocation3], %s254
        %s256 = sand.u32 %s45, 1
        %s257 = smul.addr %s256, 16
        %s258 = scalar_lea.vmem [#allocation2], %s257
        // Predicated region
        $region41: #{tpu_custom_call.1} parent=39 // pred_check
          %p259 = pneg %p58
        $region42: #{tpu_custom_call.1} parent=39 // pred_check_branch
          %261 = sbr.rel (%p259) target = $region44
        $region43: #{tpu_custom_call.1} parent=39 // pred_region
          %262 = dma.done %s255, 256
        $region44: #{tpu_custom_call.1} parent=39 // pred_fallthru
          _
        // Predicated region
        $region45: #{tpu_custom_call.1} parent=39 // pred_check
          %p263 = pneg %p79
        $region46: #{tpu_custom_call.1} parent=39 // pred_check_branch
          %265 = sbr.rel (%p263) target = $region48
        $region47: #{tpu_custom_call.1} parent=39 // pred_region
          %266 = dma.done [#allocation6], 4096
        $region48: #{tpu_custom_call.1} parent=39 // pred_fallthru
          _
        // Predicated region
        $region49: #{tpu_custom_call.1} parent=39 // pred_check
          %p267 = pneg %p105
        $region50: #{tpu_custom_call.1} parent=39 // pred_check_branch
          %269 = sbr.rel (%p267) target = $region52
        $region51: #{tpu_custom_call.1} parent=39 // pred_region
          %270 = dma.done [#allocation6], 128
        $region52: #{tpu_custom_call.1} parent=39 // pred_fallthru
          _
        %s271 = sand.u32 %s45, 1
        %s272 = scalar_lea.sflag [#allocation3], %s271
        %s273 = sand.u32 %s45, 1
        %s274 = smul.addr %s273, 16
        %s275 = scalar_lea.vmem [#allocation2], %s274
        %p276 = pneg %p58
        %p277 = pneg %p55
        %p278 = pneg %p79
        %p279 = pneg %p76
        %p280 = pneg %p105
        %p281 = pneg %p102
        %p282 = pneg %p126
        %p283 = pneg %p123
        %p284 = pneg %p147
        %p285 = pneg %p144
        %p286 = pneg %p175
        %p287 = pneg %p172
        %s288 = sand.u32 %s162, 1
        %s289 = scalar_lea.sflag [#allocation4], %s288
        %s290 = sand.u32 %s162, 1
        %s291 = smul.addr %s290, 8
        %s292 = scalar_lea.vmem [#allocation8], %s291
        %v293 = vld [vmem:[%s258] sm:$0xff]
        %v294 = vld [vmem:[%s258 + $0x8] sm:$0xff]
        %v295 = vld [vmem:[#allocation5] sm:$0xff]
        %v296 = vld [vmem:[#allocation5 + $0x8] sm:$0xff]
        %v297 = vld [vmem:[#allocation5 + $0x10] sm:$0xff]
        %v298 = vld [vmem:[#allocation5 + $0x18] sm:$0xff]
        %v299 = vld [vmem:[#allocation5 + $0x20] sm:$0xff]
        %v300 = vld [vmem:[#allocation5 + $0x28] sm:$0xff]
        %v301 = vld [vmem:[#allocation5 + $0x30] sm:$0xff]
        %v302 = vld [vmem:[#allocation5 + $0x38] sm:$0xff]
        %v303 = vld [vmem:[#allocation5 + $0x40] sm:$0xff]
        %v304 = vld [vmem:[#allocation5 + $0x48] sm:$0xff]
        %v305 = vld [vmem:[#allocation5 + $0x50] sm:$0xff]
        %v306 = vld [vmem:[#allocation5 + $0x58] sm:$0xff]
        %v307 = vld [vmem:[#allocation5 + $0x60] sm:$0xff]
        %v308 = vld [vmem:[#allocation5 + $0x68] sm:$0xff]
        %v309 = vld [vmem:[#allocation5 + $0x70] sm:$0xff]
        %v310 = vld [vmem:[#allocation5 + $0x78] sm:$0xff]
        %v311 = vld [vmem:[#allocation5 + $0x80] sm:$0xff]
        %v312 = vld [vmem:[#allocation5 + $0x88] sm:$0xff]
        %v313 = vld [vmem:[#allocation5 + $0x90] sm:$0xff]
        %v314 = vld [vmem:[#allocation5 + $0x98] sm:$0xff]
        %v315 = vld [vmem:[#allocation5 + $0xa0] sm:$0xff]
        %v316 = vld [vmem:[#allocation5 + $0xa8] sm:$0xff]
        %v317 = vld [vmem:[#allocation5 + $0xb0] sm:$0xff]
        %v318 = vld [vmem:[#allocation5 + $0xb8] sm:$0xff]
        %v319 = vld [vmem:[#allocation5 + $0xc0] sm:$0xff]
        %v320 = vld [vmem:[#allocation5 + $0xc8] sm:$0xff]
        %v321 = vld [vmem:[#allocation5 + $0xd0] sm:$0xff]
        %v322 = vld [vmem:[#allocation5 + $0xd8] sm:$0xff]
        %v323 = vld [vmem:[#allocation5 + $0xe0] sm:$0xff]
        %v324 = vld [vmem:[#allocation5 + $0xe8] sm:$0xff]
        %v325 = vld [vmem:[#allocation5 + $0xf0] sm:$0xff]
        %v326 = vld [vmem:[#allocation5 + $0xf8] sm:$0xff]
        %v327 = vld [vmem:[#allocation7] sm:$0xff]
        %328 = vmatprep.subr.mxu0 0.0
        %329 = vmatpush1.msra.mxu0 %v295
        %330 = vmatprep.subr.mxu0 0.0
        %331 = vmatpush1.msra.mxu0 %v296
        %332 = vmatprep.subr.mxu0 0.0
        %333 = vmatpush1.msra.mxu0 %v297
        %334 = vmatprep.subr.mxu0 0.0
        %335 = vmatpush1.msra.mxu0 %v298
        %336 = vmatprep.subr.mxu0 0.0
        %337 = vmatpush1.msra.mxu0 %v299
        %338 = vmatprep.subr.mxu0 0.0
        %339 = vmatpush1.msra.mxu0 %v300
        %340 = vmatprep.subr.mxu0 0.0
        %341 = vmatpush1.msra.mxu0 %v301
        %342 = vmatprep.subr.mxu0 0.0
        %343 = vmatpush1.msra.mxu0 %v302
        %344 = vmatprep.subr.mxu0 0.0
        %345 = vmatpush1.msra.mxu0 %v303
        %346 = vmatprep.subr.mxu0 0.0
        %347 = vmatpush1.msra.mxu0 %v304
        %348 = vmatprep.subr.mxu0 0.0
        %349 = vmatpush1.msra.mxu0 %v305
        %350 = vmatprep.subr.mxu0 0.0
        %351 = vmatpush1.msra.mxu0 %v306
        %352 = vmatprep.subr.mxu0 0.0
        %353 = vmatpush1.msra.mxu0 %v307
        %354 = vmatprep.subr.mxu0 0.0
        %355 = vmatpush1.msra.mxu0 %v308
        %356 = vmatprep.subr.mxu0 0.0
        %357 = vmatpush1.msra.mxu0 %v309
        %358 = vmatprep.subr.mxu0 0.0
        %359 = vmatpush1.msra.mxu0 %v310
        %360 = vmatprep.subr.mxu0 0.0
        %361 = vmatpush1.msra.mxu0 %v311
        %362 = vmatprep.subr.mxu0 0.0
        %363 = vmatpush1.msra.mxu0 %v312
        %364 = vmatprep.subr.mxu0 0.0
        %365 = vmatpush1.msra.mxu0 %v313
        %366 = vmatprep.subr.mxu0 0.0
        %367 = vmatpush1.msra.mxu0 %v314
        %368 = vmatprep.subr.mxu0 0.0
        %369 = vmatpush1.msra.mxu0 %v315
        %370 = vmatprep.subr.mxu0 0.0
        %371 = vmatpush1.msra.mxu0 %v316
        %372 = vmatprep.subr.mxu0 0.0
        %373 = vmatpush1.msra.mxu0 %v317
        %374 = vmatprep.subr.mxu0 0.0
        %375 = vmatpush1.msra.mxu0 %v318
        %376 = vmatprep.subr.mxu0 0.0
        %377 = vmatpush1.msra.mxu0 %v319
        %378 = vmatprep.subr.mxu0 0.0
        %379 = vmatpush1.msra.mxu0 %v320
        %380 = vmatprep.subr.mxu0 0.0
        %381 = vmatpush1.msra.mxu0 %v321
        %382 = vmatprep.subr.mxu0 0.0
        %383 = vmatpush1.msra.mxu0 %v322
        %384 = vmatprep.subr.mxu0 0.0
        %385 = vmatpush1.msra.mxu0 %v323
        %386 = vmatprep.subr.mxu0 0.0
        %387 = vmatpush1.msra.mxu0 %v324
        %388 = vmatprep.subr.mxu0 0.0
        %389 = vmatpush1.msra.mxu0 %v325
        %390 = vmatprep.subr.mxu0 0.0
        %391 = vmatpush1.msra.mxu0 %v326
        %392 = vmatprep.mubr.f32.mxu0 %v294
        %393 = vmatmul.mubr.f32.gmra.mrb[0].mxu0 %v293
        %v394 = vpop.f32.mrb[0].mxu0
        %v395 = vadd.f32 %v327, %v394
        %v396 = vpop.f32.mrb[0].mxu0
        %397 = vdwg.mxu0
        %398 = vadd.xlane.f32.xlu0 %v395
        %v399 = vpop.xlane.xlu0 %398
        %v400 = vmul.f32 %v399, 0.03125
        %v401 = vmul.f32 %v395, %v395
        %402 = vadd.xlane.f32.xlu0 %v401
        %v403 = vpop.xlane.xlu0 %402
        %v404 = vmul.f32 %v403, 0.03125
        %v405 = vmul.f32 %v400, %v400
        %v406 = vsub.f32 %v404, %v405
        %v407 = vmax.f32 %v406, 0.0
        %v408 = vsub.f32 %v395, %v400
        %v409 = vadd.f32 %v407, 1e-05
        %v410 = vrsqrt.pop %v409
        %v411 = vmul.f32 %v408, %v410
        %v412 = vld [vmem:[%s3] sm:$0x1]
        %v414 = vlaneseq
        %v415 = vshrl.u32 %v414, 7
        %v416 = vsub.s32 0, %v415
        %v417 = vrot.slane %v412, %v416
        %v419 = vmul.f32 %v411, %v417
        %v420 = vld [vmem:[%s4] sm:$0x1]
        %v422 = vlaneseq
        %v423 = vshrl.u32 %v422, 7
        %v424 = vsub.s32 0, %v423
        %v425 = vrot.slane %v420, %v424
        %v427 = vadd.f32 %v419, %v425
        %428 = vst [vmem:[%s292] sm:$0xff] %v427
        %s429 = sand.u32 %s162, 1
        %s430 = scalar_lea.sflag [#allocation4], %s429
        %s431 = sand.u32 %s162, 1
        %s432 = smul.addr %s431, 8
        %s433 = scalar_lea.vmem [#allocation8], %s432
        // Predicated region
        $region53: #{tpu_custom_call.1} parent=39 // pred_check
          %p434 = pneg %p172
        $region54: #{tpu_custom_call.1} parent=39 // pred_check_branch
          %436 = sbr.rel (%p434) target = $region56
        $region55: #{tpu_custom_call.1} parent=39 // pred_region
          %s438 = ssub.s32 128, 128
          %439 = vsyncadd %s430, %s438
          %s440 = sadd.s32 %s27, %s28
          %s441 = smul.addr %s440, 128
          %s442 = scalar_lea.hbm %s5, %s441
          %s444 = sshll.u32 %s433, 4
          %s445 = int_to_ptr.vmem [resolvable:$true] %s444
          %447 = dma.vmem_to_hbm [thread:$0]  %s445, 128, %s442, %s430
        $region56: #{tpu_custom_call.1} parent=39 // pred_fallthru
          _
      $region40: #{tpu_custom_call.1} parent=5 // pred_fallthru
        _
      %p448 = scmp.le.s32.totalorder 2, %s18
      // Predicated region
      $region57: #{tpu_custom_call.1} parent=5 // pred_check
        %p449 = pneg %p448
      $region58: #{tpu_custom_call.1} parent=5 // pred_check_branch
        %451 = sbr.rel (%p449) target = $region60
      $region59: #{tpu_custom_call.1} parent=5 // pred_region
        %s452 = ssub.s32 %s18, 2
        // Predicated region
        $region61: #{tpu_custom_call.1} parent=59 // pred_check
          %p453 = pneg %p178
        $region62: #{tpu_custom_call.1} parent=59 // pred_check_branch
          %455 = sbr.rel (%p453) target = $region64
        $region63: #{tpu_custom_call.1} parent=59 // pred_region
          %s456 = sand.u32 %s163, 1
          %s457 = scalar_lea.sflag [#allocation4], %s456
          %s458 = sand.u32 %s163, 1
          %s459 = smul.addr %s458, 8
          %s460 = scalar_lea.vmem [#allocation8], %s459
          %461 = dma.done %s457, 128
        $region64: #{tpu_custom_call.1} parent=59 // pred_fallthru
          _
      $region60: #{tpu_custom_call.1} parent=5 // pred_fallthru
        _
    $region6: #{tpu_custom_call.1} parent=1 // loop_footer
      %s22 = sadd.s32 1, %s18
    $region7: #{tpu_custom_call.1} parent=1 // loop_footer_branch
      %17 = sbr.rel target = $region3
    $region8: #{tpu_custom_call.1} parent=1 // loop_exit
      _
    %462 = vsyncpa [#allocation3], 1
    %s463 = scalar_lea.sflag [#allocation3], 1
    %464 = vsyncpa %s463, 1
    %465 = vsyncpa [#allocation6], 1
    %466 = vsyncpa [#allocation4], 1
    %s467 = scalar_lea.sflag [#allocation4], 1
    %468 = vsyncpa %s467, 1

// kernel: tpu_custom_call.1
$region0: #{tpu_custom_call.1}
  #allocation0 [shape = 'u32[]', space=smem, size = 0x4, offset = 0x4, fixed_abs, tag = 'smem constant byte address 0x4 - core index']
  #allocation1 [shape = 'u32[144,128]{1,0:T(1,128)}', space=vmem, size = 0x12000, scoped, tag = 'internal scratch']
  %s0 = inlined_call_operand.hbm [shape: f32[2,8,256], index: 0, kind: input, shape index: {}]
  %s1 = inlined_call_operand.hbm [shape: f32[256,128], index: 1, kind: input, shape index: {}]
  %s2 = inlined_call_operand.hbm [shape: f32[8,128], index: 2, kind: input, shape index: {}]
  %s3 = inlined_call_operand.vmem [shape: f32[1,128], index: 3, kind: input, shape index: {}]
  %s4 = inlined_call_operand.vmem [shape: f32[1,128], index: 4, kind: input, shape index: {}]
  %s5 = inlined_call_operand.hbm [shape: f32[2,8,128], index: 5, kind: output, shape index: {}]
  %s6 = sld [smem:[#allocation0]]
  $region65: #{tpu_custom_call.1} parent=0
    _
  %s8 = ssub.s32 1, %s6
  %s9 = scalar_select 0, %s8, %s6
  $region1: #{tpu_custom_call.1} parent=0
    #allocation2 [shape = 'u8[16384]{0}', space=vmem, size = 0x4000, scoped, tag = 'input window, operand 0']
    #allocation3 [shape = 's32[2]{0}', space=sflag, size = 0x8, scoped, tag = 'scoped memory for tpu_custom_call.1']
    #allocation4 [shape = 's32[2]{0}', space=sflag, size = 0x8, scoped, tag = 'scoped memory for tpu_custom_call.1']
    #allocation5 [shape = 'u8[131072]{0}', space=vmem, size = 0x20000, scoped, tag = 'input window, operand 1, single buffered']
    #allocation6 [shape = 's32[1]{0}', space=sflag, size = 0x4, scoped, tag = 'scoped memory for tpu_custom_call.1']
    #allocation7 [shape = 'u8[4096]{0}', space=vmem, size = 0x1000, scoped, tag = 'input window, operand 2, single buffered']
    #allocation8 [shape = 'u8[8192]{0}', space=vmem, size = 0x2000, scoped, tag = 'output window, operand 0']
    %10 = vsyncpa [#allocation3], 0
    %s11 = scalar_lea.sflag [#allocation3], 1
    %12 = vsyncpa %s11, 0
    %13 = vsyncpa [#allocation6], 0
    %14 = vsyncpa [#allocation4], 0
    %s15 = scalar_lea.sflag [#allocation4], 1
    %16 = vsyncpa %s15, 0
    loop: start=0, step=1, limit=4
    $region2: #{tpu_custom_call.1} parent=1 // loop_pre_header
      _
    $region3: #{tpu_custom_call.1} parent=1 // loop_header
      %s18 = sphi 0, %s22
      %p19 = scmp.ge.s32.totalorder %s18, 4
      %s25 = sphi 0, %s37
      %s26 = sphi 0, %s33
      %s27 = sphi 0, %s25
      %s28 = sphi 0, %s26
      %s29 = sphi 0, %s27
      %s30 = sphi 0, %s28
      %s42 = sphi 0, %s44
      %s45 = sphi 0, %s42
      %s46 = sphi 0, %s45
      %s62 = sphi 0, %s46
      %s66 = sphi 0, %s66
      %s68 = sphi 0, %s66
      %s69 = sphi 0, %s68
      %s83 = sphi 0, %s69
      %s89 = sphi 0, %s91
      %s92 = sphi 0, %s89
      %s93 = sphi 0, %s92
      %s109 = sphi 0, %s93
      %s113 = sphi 0, %s113
      %s115 = sphi 0, %s113
      %s116 = sphi 0, %s115
      %s130 = sphi 0, %s116
      %s134 = sphi 0, %s134
      %s136 = sphi 0, %s134
      %s137 = sphi 0, %s136
      %s151 = sphi 0, %s137
      %s159 = sphi 0, %s161
      %s162 = sphi 0, %s159
      %s163 = sphi 0, %s162
      %s179 = sphi 0, %s163
    $region4: #{tpu_custom_call.1} parent=1 // loop_header_branch
      %21 = sbr.rel (%p19) target = $region8
    $region5: #{tpu_custom_call.1} parent=1 // loop_body
      %s23 = ssub.s32 %s18, 1
      %s24 = ssub.s32 %s18, 2
      %s31 = sadd.s32 1, %s26
      %p32 = scmp.ge.s32.totalorder %s31, 2
      %s33 = scalar_select %p32, 0, %s31
      %s34 = sadd.s32 1, %s25
      %s35 = scalar_select %p32, %s34, %s25
      %p36 = scmp.ge.s32.totalorder %s35, 1
      %s37 = scalar_select %p36, 0, %s35
      %s38 = ssub.s32 %s26, %s33
      %s39 = ssub.s32 %s25, %s37
      %s40 = sor.u32 %s38, %s39
      %p41 = scmp.eq.s32.totalorder %s40, 0
      %s43 = sadd.s32 %s42, 1
      %s44 = scalar_select %p41, %s42, %s43
      %p47 = pneg %p41
      %p48 = scmp.eq.s32.totalorder %s18, 1
      %p49 = por %p47, %p48
      %p50 = scmp.ne.s32.totalorder %s42, %s45
      %p51 = scmp.eq.s32.totalorder %s18, 0
      %p52 = por %p50, %p51
      %p53 = scmp.ne.s32.totalorder %s42, %s45
      %p54 = scmp.eq.s32.totalorder %s23, 1
      %p55 = por %p53, %p54
      %p56 = scmp.ne.s32.totalorder %s45, %s46
      %p57 = scmp.eq.s32.totalorder %s23, 0
      %p58 = por %p56, %p57
      %p59 = scmp.ne.s32.totalorder %s45, %s46
      %p60 = scmp.eq.s32.totalorder %s24, 1
      %p61 = por %p59, %p60
      %p63 = scmp.ne.s32.totalorder %s46, %s62
      %p64 = scmp.eq.s32.totalorder %s24, 0
      %p65 = por %p63, %p64
      %s67 = sadd.s32 %s66, 1
      %p70 = scmp.eq.s32.totalorder %s18, 1
      %p71 = scmp.ne.s32.totalorder %s66, %s68
      %p72 = scmp.eq.s32.totalorder %s18, 0
      %p73 = por %p71, %p72
      %p74 = scmp.ne.s32.totalorder %s66, %s68
      %p75 = scmp.eq.s32.totalorder %s23, 1
      %p76 = por %p74, %p75
      %p77 = scmp.ne.s32.totalorder %s68, %s69
      %p78 = scmp.eq.s32.totalorder %s23, 0
      %p79 = por %p77, %p78
      %p80 = scmp.ne.s32.totalorder %s68, %s69
      %p81 = scmp.eq.s32.totalorder %s24, 1
      %p82 = por %p80, %p81
      %p84 = scmp.ne.s32.totalorder %s69, %s83
      %p85 = scmp.eq.s32.totalorder %s24, 0
      %p86 = por %p84, %p85
      %s87 = ssub.s32 %s25, %s37
      %p88 = scmp.eq.s32.totalorder %s87, 0
      %s90 = sadd.s32 %s89, 1
      %s91 = scalar_select %p88, %s89, %s90
      %p94 = pneg %p88
      %p95 = scmp.eq.s32.totalorder %s18, 1
      %p96 = por %p94, %p95
      %p97 = scmp.ne.s32.totalorder %s89, %s92
      %p98 = scmp.eq.s32.totalorder %s18, 0
      %p99 = por %p97, %p98
      %p100 = scmp.ne.s32.totalorder %s89, %s92
      %p101 = scmp.eq.s32.totalorder %s23, 1
      %p102 = por %p100, %p101
      %p103 = scmp.ne.s32.totalorder %s92, %s93
      %p104 = scmp.eq.s32.totalorder %s23, 0
      %p105 = por %p103, %p104
      %p106 = scmp.ne.s32.totalorder %s92, %s93
      %p107 = scmp.eq.s32.totalorder %s24, 1
      %p108 = por %p106, %p107
      %p110 = scmp.ne.s32.totalorder %s93, %s109
      %p111 = scmp.eq.s32.totalorder %s24, 0
      %p112 = por %p110, %p111
      %s114 = sadd.s32 %s113, 1
      %p117 = scmp.eq.s32.totalorder %s18, 1
      %p118 = scmp.ne.s32.totalorder %s113, %s115
      %p119 = scmp.eq.s32.totalorder %s18, 0
      %p120 = por %p118, %p119
      %p121 = scmp.ne.s32.totalorder %s113, %s115
      %p122 = scmp.eq.s32.totalorder %s23, 1
      %p123 = por %p121, %p122
      %p124 = scmp.ne.s32.totalorder %s115, %s116
      %p125 = scmp.eq.s32.totalorder %s23, 0
      %p126 = por %p124, %p125
      %p127 = scmp.ne.s32.totalorder %s115, %s116
      %p128 = scmp.eq.s32.totalorder %s24, 1
      %p129 = por %p127, %p128
      %p131 = scmp.ne.s32.totalorder %s116, %s130
      %p132 = scmp.eq.s32.totalorder %s24, 0
      %p133 = por %p131, %p132
      %s135 = sadd.s32 %s134, 1
      %p138 = scmp.eq.s32.totalorder %s18, 1
      %p139 = scmp.ne.s32.totalorder %s134, %s136
      %p140 = scmp.eq.s32.totalorder %s18, 0
      %p141 = por %p139, %p140
      %p142 = scmp.ne.s32.totalorder %s134, %s136
      %p143 = scmp.eq.s32.totalorder %s23, 1
      %p144 = por %p142, %p143
      %p145 = scmp.ne.s32.totalorder %s136, %s137
      %p146 = scmp.eq.s32.totalorder %s23, 0
      %p147 = por %p145, %p146
      %p148 = scmp.ne.s32.totalorder %s136, %s137
      %p149 = scmp.eq.s32.totalorder %s24, 1
      %p150 = por %p148, %p149
      %p152 = scmp.ne.s32.totalorder %s137, %s151
      %p153 = scmp.eq.s32.totalorder %s24, 0
      %p154 = por %p152, %p153
      %s155 = ssub.s32 %s26, %s33
      %s156 = ssub.s32 %s25, %s37
      %s157 = sor.u32 %s155, %s156
      %p158 = scmp.eq.s32.totalorder %s157, 0
      %s160 = sadd.s32 %s159, 1
      %s161 = scalar_select %p158, %s159, %s160
      %p164 = pneg %p158
      %p165 = scmp.eq.s32.totalorder %s18, 1
      %p166 = por %p164, %p165
      %p167 = scmp.ne.s32.totalorder %s159, %s162
      %p168 = scmp.eq.s32.totalorder %s18, 0
      %p169 = por %p167, %p168
      %p170 = scmp.ne.s32.totalorder %s159, %s162
      %p171 = scmp.eq.s32.totalorder %s23, 1
      %p172 = por %p170, %p171
      %p173 = scmp.ne.s32.totalorder %s162, %s163
      %p174 = scmp.eq.s32.totalorder %s23, 0
      %p175 = por %p173, %p174
      %p176 = scmp.ne.s32.totalorder %s162, %s163
      %p177 = scmp.eq.s32.totalorder %s24, 1
      %p178 = por %p176, %p177
      %p180 = scmp.ne.s32.totalorder %s163, %s179
      %p181 = scmp.eq.s32.totalorder %s24, 0
      %p182 = por %p180, %p181
      %p183 = scmp.le.s32.totalorder 1, %s18
      %p184 = scmp.lt.s32.totalorder %s18, 3
      %p185 = pnand %p183, %p184
      %p186 = pneg %p185
      // Predicated region
      $region9: #{tpu_custom_call.1} parent=5 // pred_check
        _
      $region10: #{tpu_custom_call.1} parent=5 // pred_check_branch
        %188 = sbr.rel (%p185) target = $region12
      $region11: #{tpu_custom_call.1} parent=5 // pred_region
        %s189 = ssub.s32 %s18, 1
        // Predicated region
        $region13: #{tpu_custom_call.1} parent=11 // pred_check
          %p190 = pneg %p79
        $region14: #{tpu_custom_call.1} parent=11 // pred_check_branch
          %192 = sbr.rel (%p190) target = $region16
        $region15: #{tpu_custom_call.1} parent=11 // pred_region
          %s194 = ssub.s32 4096, 4096
          %195 = vsyncadd [#allocation6], %s194
          %s196 = sshll.u32 [#allocation5], 4
          %s197 = int_to_ptr.vmem [resolvable:$true] %s196
          %202 = dma.hbm_to_vmem [thread:$0]  %s1, 4096, %s197, [#allocation6], 128, 128, 8
        $region16: #{tpu_custom_call.1} parent=11 // pred_fallthru
          _
        // Predicated region
        $region17: #{tpu_custom_call.1} parent=11 // pred_check
          %p203 = pneg %p105
        $region18: #{tpu_custom_call.1} parent=11 // pred_check_branch
          %205 = sbr.rel (%p203) target = $region20
        $region19: #{tpu_custom_call.1} parent=11 // pred_region
          %s207 = ssub.s32 128, 128
          %208 = vsyncadd [#allocation6], %s207
          %s209 = smul.addr %s27, 128
          %s210 = scalar_lea.hbm %s2, %s209
          %s212 = sshll.u32 [#allocation7], 4
          %s213 = int_to_ptr.vmem [resolvable:$true] %s212
          %215 = dma.hbm_to_vmem [thread:$0]  %s210, 128, %s213, [#allocation6]
        $region20: #{tpu_custom_call.1} parent=11 // pred_fallthru
          _
        // Predicated region
        $region21: #{tpu_custom_call.1} parent=11 // pred_check
          %p216 = pneg %p126
        $region22: #{tpu_custom_call.1} parent=11 // pred_check_branch
          %218 = sbr.rel (%p216) target = $region24
        $region23: #{tpu_custom_call.1} parent=11 // pred_region
          _
        $region24: #{tpu_custom_call.1} parent=11 // pred_fallthru
          _
        // Predicated region
        $region25: #{tpu_custom_call.1} parent=11 // pred_check
          %p219 = pneg %p147
        $region26: #{tpu_custom_call.1} parent=11 // pred_check_branch
          %221 = sbr.rel (%p219) target = $region28
        $region27: #{tpu_custom_call.1} parent=11 // pred_region
          _
        $region28: #{tpu_custom_call.1} parent=11 // pred_fallthru
          _
      $region12: #{tpu_custom_call.1} parent=5 // pred_fallthru
        _
      %p222 = scmp.lt.s32.totalorder %s18, 2
      // Predicated region
      $region29: #{tpu_custom_call.1} parent=5 // pred_check
        %p223 = pneg %p222
      $region30: #{tpu_custom_call.1} parent=5 // pred_check_branch
        %225 = sbr.rel (%p223) target = $region32
      $region31: #{tpu_custom_call.1} parent=5 // pred_region
        // Predicated region
        $region33: #{tpu_custom_call.1} parent=31 // pred_check
          %p226 = pneg %p52
        $region34: #{tpu_custom_call.1} parent=31 // pred_check_branch
          %228 = sbr.rel (%p226) target = $region36
        $region35: #{tpu_custom_call.1} parent=31 // pred_region
          %s229 = sand.u32 %s42, 1
          %s230 = scalar_lea.sflag [#allocation3], %s229
          %s231 = sand.u32 %s42, 1
          %s232 = smul.addr %s231, 16
          %s233 = scalar_lea.vmem [#allocation2], %s232
          %s235 = ssub.s32 256, 256
          %236 = vsyncadd %s230, %s235
          %s237 = smul.addr %s25, 2
          %s238 = smul.addr %s26, 2
          %s239 = sadd.s32 %s237, %s238
          %s240 = smul.addr %s239, 128
          %s241 = scalar_lea.hbm %s0, %s240
          %s243 = sshll.u32 %s233, 4
          %s244 = int_to_ptr.vmem [resolvable:$true] %s243
          %246 = dma.hbm_to_vmem [thread:$0]  %s241, 256, %s244, %s230
        $region36: #{tpu_custom_call.1} parent=31 // pred_fallthru
          _
      $region32: #{tpu_custom_call.1} parent=5 // pred_fallthru
        _
      %p247 = scmp.le.s32.totalorder 1, %s18
      %p248 = scmp.lt.s32.totalorder %s18, 3
      %p249 = pnand %p247, %p248
      %p250 = pneg %p249
      // Predicated region
      $region37: #{tpu_custom_call.1} parent=5 // pred_check
        _
      $region38: #{tpu_custom_call.1} parent=5 // pred_check_branch
        %252 = sbr.rel (%p249) target = $region40
      $region39: #{tpu_custom_call.1} parent=5 // pred_region
        %s253 = ssub.s32 %s18, 1
        %s254 = sand.u32 %s45, 1
        %s255 = scalar_lea.sflag [#allocation3], %s254
        %s256 = sand.u32 %s45, 1
        %s257 = smul.addr %s256, 16
        %s258 = scalar_lea.vmem [#allocation2], %s257
        // Predicated region
        $region41: #{tpu_custom_call.1} parent=39 // pred_check
          %p259 = pneg %p58
        $region42: #{tpu_custom_call.1} parent=39 // pred_check_branch
          %261 = sbr.rel (%p259) target = $region44
        $region43: #{tpu_custom_call.1} parent=39 // pred_region
          %262 = dma.done %s255, 256
        $region44: #{tpu_custom_call.1} parent=39 // pred_fallthru
          _
        // Predicated region
        $region45: #{tpu_custom_call.1} parent=39 // pred_check
          %p263 = pneg %p79
        $region46: #{tpu_custom_call.1} parent=39 // pred_check_branch
          %265 = sbr.rel (%p263) target = $region48
        $region47: #{tpu_custom_call.1} parent=39 // pred_region
          %266 = dma.done [#allocation6], 4096
        $region48: #{tpu_custom_call.1} parent=39 // pred_fallthru
          _
        // Predicated region
        $region49: #{tpu_custom_call.1} parent=39 // pred_check
          %p267 = pneg %p105
        $region50: #{tpu_custom_call.1} parent=39 // pred_check_branch
          %269 = sbr.rel (%p267) target = $region52
        $region51: #{tpu_custom_call.1} parent=39 // pred_region
          %270 = dma.done [#allocation6], 128
        $region52: #{tpu_custom_call.1} parent=39 // pred_fallthru
          _
        %s271 = sand.u32 %s45, 1
        %s272 = scalar_lea.sflag [#allocation3], %s271
        %s273 = sand.u32 %s45, 1
        %s274 = smul.addr %s273, 16
        %s275 = scalar_lea.vmem [#allocation2], %s274
        %p276 = pneg %p58
        %p277 = pneg %p55
        %p278 = pneg %p79
        %p279 = pneg %p76
        %p280 = pneg %p105
        %p281 = pneg %p102
        %p282 = pneg %p126
        %p283 = pneg %p123
        %p284 = pneg %p147
        %p285 = pneg %p144
        %p286 = pneg %p175
        %p287 = pneg %p172
        %s288 = sand.u32 %s162, 1
        %s289 = scalar_lea.sflag [#allocation4], %s288
        %s290 = sand.u32 %s162, 1
        %s291 = smul.addr %s290, 8
        %s292 = scalar_lea.vmem [#allocation8], %s291
        %v293 = vld [vmem:[%s258] sm:$0xff]
        %v294 = vld [vmem:[%s258 + $0x8] sm:$0xff]
        %v295 = vld [vmem:[#allocation5] sm:$0xff]
        %v296 = vld [vmem:[#allocation5 + $0x8] sm:$0xff]
        %v297 = vld [vmem:[#allocation5 + $0x10] sm:$0xff]
        %v298 = vld [vmem:[#allocation5 + $0x18] sm:$0xff]
        %v299 = vld [vmem:[#allocation5 + $0x20] sm:$0xff]
        %v300 = vld [vmem:[#allocation5 + $0x28] sm:$0xff]
        %v301 = vld [vmem:[#allocation5 + $0x30] sm:$0xff]
        %v302 = vld [vmem:[#allocation5 + $0x38] sm:$0xff]
        %v303 = vld [vmem:[#allocation5 + $0x40] sm:$0xff]
        %v304 = vld [vmem:[#allocation5 + $0x48] sm:$0xff]
        %v305 = vld [vmem:[#allocation5 + $0x50] sm:$0xff]
        %v306 = vld [vmem:[#allocation5 + $0x58] sm:$0xff]
        %v307 = vld [vmem:[#allocation5 + $0x60] sm:$0xff]
        %v308 = vld [vmem:[#allocation5 + $0x68] sm:$0xff]
        %v309 = vld [vmem:[#allocation5 + $0x70] sm:$0xff]
        %v310 = vld [vmem:[#allocation5 + $0x78] sm:$0xff]
        %v311 = vld [vmem:[#allocation5 + $0x80] sm:$0xff]
        %v312 = vld [vmem:[#allocation5 + $0x88] sm:$0xff]
        %v313 = vld [vmem:[#allocation5 + $0x90] sm:$0xff]
        %v314 = vld [vmem:[#allocation5 + $0x98] sm:$0xff]
        %v315 = vld [vmem:[#allocation5 + $0xa0] sm:$0xff]
        %v316 = vld [vmem:[#allocation5 + $0xa8] sm:$0xff]
        %v317 = vld [vmem:[#allocation5 + $0xb0] sm:$0xff]
        %v318 = vld [vmem:[#allocation5 + $0xb8] sm:$0xff]
        %v319 = vld [vmem:[#allocation5 + $0xc0] sm:$0xff]
        %v320 = vld [vmem:[#allocation5 + $0xc8] sm:$0xff]
        %v321 = vld [vmem:[#allocation5 + $0xd0] sm:$0xff]
        %v322 = vld [vmem:[#allocation5 + $0xd8] sm:$0xff]
        %v323 = vld [vmem:[#allocation5 + $0xe0] sm:$0xff]
        %v324 = vld [vmem:[#allocation5 + $0xe8] sm:$0xff]
        %v325 = vld [vmem:[#allocation5 + $0xf0] sm:$0xff]
        %v326 = vld [vmem:[#allocation5 + $0xf8] sm:$0xff]
        %v327 = vld [vmem:[#allocation7] sm:$0xff]
        %328 = vmatprep.subr.mxu0 0.0
        %329 = vmatpush1.msra.mxu0 %v295
        %330 = vmatprep.subr.mxu0 0.0
        %331 = vmatpush1.msra.mxu0 %v296
        %332 = vmatprep.subr.mxu0 0.0
        %333 = vmatpush1.msra.mxu0 %v297
        %334 = vmatprep.subr.mxu0 0.0
        %335 = vmatpush1.msra.mxu0 %v298
        %336 = vmatprep.subr.mxu0 0.0
        %337 = vmatpush1.msra.mxu0 %v299
        %338 = vmatprep.subr.mxu0 0.0
        %339 = vmatpush1.msra.mxu0 %v300
        %340 = vmatprep.subr.mxu0 0.0
        %341 = vmatpush1.msra.mxu0 %v301
        %342 = vmatprep.subr.mxu0 0.0
        %343 = vmatpush1.msra.mxu0 %v302
        %344 = vmatprep.subr.mxu0 0.0
        %345 = vmatpush1.msra.mxu0 %v303
        %346 = vmatprep.subr.mxu0 0.0
        %347 = vmatpush1.msra.mxu0 %v304
        %348 = vmatprep.subr.mxu0 0.0
        %349 = vmatpush1.msra.mxu0 %v305
        %350 = vmatprep.subr.mxu0 0.0
        %351 = vmatpush1.msra.mxu0 %v306
        %352 = vmatprep.subr.mxu0 0.0
        %353 = vmatpush1.msra.mxu0 %v307
        %354 = vmatprep.subr.mxu0 0.0
        %355 = vmatpush1.msra.mxu0 %v308
        %356 = vmatprep.subr.mxu0 0.0
        %357 = vmatpush1.msra.mxu0 %v309
        %358 = vmatprep.subr.mxu0 0.0
        %359 = vmatpush1.msra.mxu0 %v310
        %360 = vmatprep.subr.mxu0 0.0
        %361 = vmatpush1.msra.mxu0 %v311
        %362 = vmatprep.subr.mxu0 0.0
        %363 = vmatpush1.msra.mxu0 %v312
        %364 = vmatprep.subr.mxu0 0.0
        %365 = vmatpush1.msra.mxu0 %v313
        %366 = vmatprep.subr.mxu0 0.0
        %367 = vmatpush1.msra.mxu0 %v314
        %368 = vmatprep.subr.mxu0 0.0
        %369 = vmatpush1.msra.mxu0 %v315
        %370 = vmatprep.subr.mxu0 0.0
        %371 = vmatpush1.msra.mxu0 %v316
        %372 = vmatprep.subr.mxu0 0.0
        %373 = vmatpush1.msra.mxu0 %v317
        %374 = vmatprep.subr.mxu0 0.0
        %375 = vmatpush1.msra.mxu0 %v318
        %376 = vmatprep.subr.mxu0 0.0
        %377 = vmatpush1.msra.mxu0 %v319
        %378 = vmatprep.subr.mxu0 0.0
        %379 = vmatpush1.msra.mxu0 %v320
        %380 = vmatprep.subr.mxu0 0.0
        %381 = vmatpush1.msra.mxu0 %v321
        %382 = vmatprep.subr.mxu0 0.0
        %383 = vmatpush1.msra.mxu0 %v322
        %384 = vmatprep.subr.mxu0 0.0
        %385 = vmatpush1.msra.mxu0 %v323
        %386 = vmatprep.subr.mxu0 0.0
        %387 = vmatpush1.msra.mxu0 %v324
        %388 = vmatprep.subr.mxu0 0.0
        %389 = vmatpush1.msra.mxu0 %v325
        %390 = vmatprep.subr.mxu0 0.0
        %391 = vmatpush1.msra.mxu0 %v326
        %392 = vmatprep.mubr.f32.mxu0 %v294
        %393 = vmatmul.mubr.f32.gmra.mrb[0].mxu0 %v293
        %v394 = vpop.f32.mrb[0].mxu0
        %v395 = vadd.f32 %v327, %v394
        %v396 = vpop.f32.mrb[0].mxu0
        %397 = vdwg.mxu0
        %398 = vadd.xlane.f32.xlu0 %v395
        %v399 = vpop.xlane.xlu0 %398
        %v400 = vmul.f32 %v399, 0.03125
        %v401 = vmul.f32 %v395, %v395
        %402 = vadd.xlane.f32.xlu0 %v401
        %v403 = vpop.xlane.xlu0 %402
        %v404 = vmul.f32 %v403, 0.03125
        %v405 = vmul.f32 %v400, %v400
        %v406 = vsub.f32 %v404, %v405
        %v407 = vmax.f32 %v406, 0.0
        %v408 = vsub.f32 %v395, %v400
        %v409 = vadd.f32 %v407, 1e-05
        %v410 = vrsqrt.pop %v409
        %v411 = vmul.f32 %v408, %v410
        %v412 = vld [vmem:[%s3] sm:$0x1]
        %v414 = vlaneseq
        %v415 = vshrl.u32 %v414, 7
        %v416 = vsub.s32 0, %v415
        %v417 = vrot.slane %v412, %v416
        %v419 = vmul.f32 %v411, %v417
        %v420 = vld [vmem:[%s4] sm:$0x1]
        %v422 = vlaneseq
        %v423 = vshrl.u32 %v422, 7
        %v424 = vsub.s32 0, %v423
        %v425 = vrot.slane %v420, %v424
        %v427 = vadd.f32 %v419, %v425
        %428 = vst [vmem:[%s292] sm:$0xff] %v427
        %s429 = sand.u32 %s162, 1
        %s430 = scalar_lea.sflag [#allocation4], %s429
        %s431 = sand.u32 %s162, 1
        %s432 = smul.addr %s431, 8
        %s433 = scalar_lea.vmem [#allocation8], %s432
        // Predicated region
        $region53: #{tpu_custom_call.1} parent=39 // pred_check
          %p434 = pneg %p172
        $region54: #{tpu_custom_call.1} parent=39 // pred_check_branch
          %436 = sbr.rel (%p434) target = $region56
        $region55: #{tpu_custom_call.1} parent=39 // pred_region
          %s438 = ssub.s32 128, 128
          %439 = vsyncadd %s430, %s438
          %s440 = sadd.s32 %s27, %s28
          %s441 = smul.addr %s440, 128
          %s442 = scalar_lea.hbm %s5, %s441
          %s444 = sshll.u32 %s433, 4
          %s445 = int_to_ptr.vmem [resolvable:$true] %s444
          %447 = dma.vmem_to_hbm [thread:$0]  %s445, 128, %s442, %s430
        $region56: #{tpu_custom_call.1} parent=39 // pred_fallthru
          _
      $region40: #{tpu_custom_call.1} parent=5 // pred_fallthru
        _
      %p448 = scmp.le.s32.totalorder 2, %s18
      // Predicated region
      $region57: #{tpu_custom_call.1} parent=5 // pred_check
        %p449 = pneg %p448
      $region58: #{tpu_custom_call.1} parent=5 // pred_check_branch
        %451 = sbr.rel (%p449) target = $region60
      $region59: #{tpu_custom_call.1} parent=5 // pred_region
        %s452 = ssub.s32 %s18, 2
        // Predicated region
        $region61: #{tpu_custom_call.1} parent=59 // pred_check
          %p453 = pneg %p178
        $region62: #{tpu_custom_call.1} parent=59 // pred_check_branch
          %455 = sbr.rel (%p453) target = $region64
        $region63: #{tpu_custom_call.1} parent=59 // pred_region
          %s456 = sand.u32 %s163, 1
          %s457 = scalar_lea.sflag [#allocation4], %s456
          %s458 = sand.u32 %s163, 1
          %s459 = smul.addr %s458, 8
          %s460 = scalar_lea.vmem [#allocation8], %s459
          %461 = dma.done %s457, 128
        $region64: #{tpu_custom_call.1} parent=59 // pred_fallthru
          _
      $region60: #{tpu_custom_call.1} parent=5 // pred_fallthru
        _
    $region6: #{tpu_custom_call.1} parent=1 // loop_footer
      %s22 = sadd.s32 1, %s18
    $region7: #{tpu_custom_call.1} parent=1 // loop_footer_branch
      %17 = sbr.rel target = $region3
    $region8: #{tpu_custom_call.1} parent=1 // loop_exit
      _
    %462 = vsyncpa [#allocation3], 1
    %s463 = scalar_lea.sflag [#allocation3], 1
    %464 = vsyncpa %s463, 1
    %465 = vsyncpa [#allocation6], 1
    %466 = vsyncpa [#allocation4], 1
    %s467 = scalar_lea.sflag [#allocation4], 1
    %468 = vsyncpa %s467, 1

</llo_original>
